<compile_context>
chip_gen: v7x
topology: tpu7x:2x2x1
jax: 0.10.0
libtpu: 0.0.40
codegen_flags: <defaults>
</compile_context>

<pallas_src>
import jax
import jax.numpy as jnp
from jax.experimental import pallas as pl
from jax.experimental.pallas import tpu as pltpu


def _reparam_gemm_kernel(p_ref, w_ref, b_ref, o_ref):
    """Fused both-branch conv-as-GEMM + folded-BN bias + ReLU, one batch item.

    p_ref: (1, 9*Cin, H*W)  im2col slab, K-major index = (ky*3+kx)*Cin + cin
    w_ref: (C2, 9*Cin)      BN-scale-folded weights (mu channels then logvar)
    b_ref: (C2, 1)          folded BN bias
    o_ref: (1, C2, H*W)     lane-dense output (H*W on the lane dim)
    """
    acc = jnp.dot(w_ref[...], p_ref[0],
                  preferred_element_type=jnp.float32)          # (C2, H*W) MXU
    o_ref[0] = jnp.maximum(acc + b_ref[...], 0.0).astype(o_ref.dtype)


def reparam_block_spatial(x, mu_w, mu_bn, std_w, std_bn, eps=1e-5):
    """x: (N, Cin, H, W) NCHW. mu_w/std_w: (Cout, Cin, 3, 3).
    mu_bn/std_bn: tuples (gamma, beta, running_mean, running_var), each (Cout,).
    Returns (mu, logvar), each (N, Cout, H, W)."""
    n, cin, h, w = x.shape
    cout = mu_w.shape[0]
    c2 = 2 * cout
    k = 9 * cin
    m = h * w

    def fold(bn):
        gamma, beta, mean, var = bn
        scale = gamma / jnp.sqrt(var + eps)
        return scale, beta - mean * scale

    mu_s, mu_b = fold(mu_bn)
    st_s, st_b = fold(std_bn)

    # Fuse the two branches along output channels and fold the BN scale
    # straight into the conv weights.
    w_cat = jnp.concatenate([mu_w * mu_s[:, None, None, None],
                             std_w * st_s[:, None, None, None]],
                            axis=0)                               # (C2,Cin,3,3)
    # K layout = (ky*3 + kx)*Cin + cin  — must match the im2col slab below.
    w_fused = jnp.transpose(w_cat, (0, 2, 3, 1)).reshape(c2, k)   # (C2, 9*Cin)
    b_fused = jnp.concatenate([mu_b, st_b]).reshape(c2, 1)        # (C2, 1)

    # im2col in the wrapper: one zero-pad, then the 9 shifted views stacked
    # along a K axis (no NCHW->NHWC transpose anywhere).
    x_pad = jnp.pad(x, ((0, 0), (0, 0), (1, 1), (1, 1)))
    taps = [x_pad[:, :, ky:ky + h, kx:kx + w].reshape(n, cin, m)
            for ky in range(3) for kx in range(3)]
    patches = jnp.concatenate(taps, axis=1)                       # (N, 9*Cin, H*W)

    out = pl.pallas_call(
        _reparam_gemm_kernel,
        out_shape=jax.ShapeDtypeStruct((n, c2, m), x.dtype),
        grid=(n,),
        in_specs=[
            pl.BlockSpec((1, k, m), lambda i: (i, 0, 0)),
            pl.BlockSpec((c2, k), lambda i: (0, 0)),
            pl.BlockSpec((c2, 1), lambda i: (0, 0)),
        ],
        out_specs=pl.BlockSpec((1, c2, m), lambda i: (i, 0, 0)),
        compiler_params=pltpu.CompilerParams(
            dimension_semantics=("parallel",)),
    )(patches, w_fused, b_fused)

    # Kernel output is already channel-major: reshape to NCHW is free.
    y = out.reshape(n, c2, h, w)
    return y[:, :cout], y[:, cout:]


if __name__ == "__main__":
    key = jax.random.PRNGKey(0)
    ks = jax.random.split(key, 6)

    N, CIN, H, W = 2, 4, 16, 16
    L = 8  # latent_size

    x = jax.random.normal(ks[0], (N, CIN, H, W), dtype=jnp.float32)
    mu_w = 0.1 * jax.random.normal(ks[1], (L, CIN, 3, 3), dtype=jnp.float32)
    std_w = 0.1 * jax.random.normal(ks[2], (L, CIN, 3, 3), dtype=jnp.float32)

    def make_bn(k):
        k1, k2, k3, k4 = jax.random.split(k, 4)
        gamma = jax.random.uniform(k1, (L,), minval=0.5, maxval=1.5,
                                   dtype=jnp.float32)
        beta = 0.1 * jax.random.normal(k2, (L,), dtype=jnp.float32)
        mean = 0.1 * jax.random.normal(k3, (L,), dtype=jnp.float32)
        var = jax.random.uniform(k4, (L,), minval=0.5, maxval=1.5,
                                 dtype=jnp.float32)
        return gamma, beta, mean, var

    mu_bn = make_bn(ks[3])
    std_bn = make_bn(ks[4])

    mu, logvar = jax.jit(reparam_block_spatial)(x, mu_w, mu_bn, std_w, std_bn)
    jax.block_until_ready((mu, logvar))

    # Pure-JAX reference (inference-mode BN), to validate the kernel.
    def ref_branch(wt, bn):
        gamma, beta, mean, var = bn
        y = jax.lax.conv_general_dilated(
            x, wt, window_strides=(1, 1), padding=((1, 1), (1, 1)),
            dimension_numbers=("NCHW", "OIHW", "NCHW"),
            precision=jax.lax.Precision.HIGHEST)
        scale = gamma / jnp.sqrt(var + 1e-5)
        bias = beta - mean * scale
        return jnp.maximum(y * scale[None, :, None, None]
                           + bias[None, :, None, None], 0.0)

    mu_ref = ref_branch(mu_w, mu_bn)
    lv_ref = ref_branch(std_w, std_bn)

    assert mu.shape == (N, L, H, W), mu.shape
    assert logvar.shape == (N, L, H, W), logvar.shape
    assert bool(jnp.allclose(mu, mu_ref, atol=2e-3, rtol=2e-3)), "mu mismatch"
    assert bool(jnp.allclose(logvar, lv_ref, atol=2e-3, rtol=2e-3)), \
        "logvar mismatch"

    print("KERNEL_OK")
</pallas_src>

<mosaic_0001>
module attributes {stable_mosaic.version = 11 : i64} {
  func.func @_reparam_gemm_kernel(%arg0: i32, %arg1: memref<1x36x256xf32, #tpu.memory_space<vmem>>, %arg2: memref<16x36xf32, #tpu.memory_space<vmem>>, %arg3: memref<16x1xf32, #tpu.memory_space<vmem>>, %arg4: memref<1x16x256xf32, #tpu.memory_space<vmem>>) attributes {dimension_semantics = [#tpu.dimension_semantics<parallel>], iteration_bounds = array<i64: 2>, scalar_prefetch = 0 : i64, scratch_operands = 0 : i64, tpu.core_type = #tpu.core_type<tc>, window_params = [{transform_indices = @transform_0, window_bounds = array<i64: 1, 36, 256>}, {pipeline_mode = #tpu.pipeline_mode<synchronous>, transform_indices = @transform_1, window_bounds = array<i64: 16, 36>}, {pipeline_mode = #tpu.pipeline_mode<synchronous>, transform_indices = @transform_2, window_bounds = array<i64: 16, 1>}, {transform_indices = @transform_3, window_bounds = array<i64: 1, 16, 256>}]} {
    %c0 = arith.constant 0 : index
    %c0_0 = arith.constant 0 : index
    %0 = vector.load %arg2[%c0, %c0_0] : memref<16x36xf32, #tpu.memory_space<vmem>>, vector<16x36xf32>
    %c0_1 = arith.constant 0 : index
    %c0_2 = arith.constant 0 : index
    %c0_3 = arith.constant 0 : index
    %1 = vector.load %arg1[%c0_1, %c0_2, %c0_3] : memref<1x36x256xf32, #tpu.memory_space<vmem>>, vector<1x36x256xf32>
    %2 = vector.shape_cast %1 : vector<1x36x256xf32> to vector<36x256xf32>
    %cst = arith.constant dense<0.000000e+00> : vector<16x256xf32>
    %3 = tpu.matmul %0, %2, %cst {dimension_numbers = #tpu.dot_dimension_numbers<[1], [0], [0], [1], [0, 0, 1, 1], [], []>} : vector<16x36xf32>, vector<36x256xf32>, vector<16x256xf32> -> vector<16x256xf32>
    %c0_4 = arith.constant 0 : index
    %c0_5 = arith.constant 0 : index
    %4 = vector.load %arg3[%c0_4, %c0_5] : memref<16x1xf32, #tpu.memory_space<vmem>>, vector<16x1xf32>
    %5 = vector.broadcast %4 : vector<16x1xf32> to vector<16x256xf32>
    %6 = arith.addf %3, %5 : vector<16x256xf32>
    %cst_6 = arith.constant 0.000000e+00 : f32
    %7 = vector.broadcast %cst_6 : f32 to vector<16x256xf32>
    %8 = arith.maximumf %6, %7 : vector<16x256xf32>
    %c0_7 = arith.constant 0 : index
    %c0_8 = arith.constant 0 : index
    %c0_9 = arith.constant 0 : index
    %9 = vector.load %arg4[%c0_7, %c0_8, %c0_9] : memref<1x16x256xf32, #tpu.memory_space<vmem>>, vector<1x16x256xf32>
    %10 = vector.shape_cast %9 : vector<1x16x256xf32> to vector<16x256xf32>
    %11 = vector.shape_cast %8 : vector<16x256xf32> to vector<1x16x256xf32>
    tpu.vector_store %arg4[%c0_7, %c0_8, %c0_9], %11 {strides = array<i32>} : memref<1x16x256xf32, #tpu.memory_space<vmem>>, vector<1x16x256xf32>,
    return
  }
  func.func @transform_0(%arg0: i32) -> (i32, i32, i32) {
    %c0_i32 = arith.constant 0 : i32
    %c0_i32_0 = arith.constant 0 : i32
    %c0_i32_1 = arith.constant 0 : i32
    return %arg0, %c0_i32, %c0_i32_0 : i32, i32, i32
  }
  func.func @transform_1(%arg0: i32) -> (i32, i32) {
    %c0_i32 = arith.constant 0 : i32
    %c0_i32_0 = arith.constant 0 : i32
    %c0_i32_1 = arith.constant 0 : i32
    return %c0_i32, %c0_i32_0 : i32, i32
  }
  func.func @transform_2(%arg0: i32) -> (i32, i32) {
    %c0_i32 = arith.constant 0 : i32
    %c0_i32_0 = arith.constant 0 : i32
    %c0_i32_1 = arith.constant 0 : i32
    return %c0_i32, %c0_i32_0 : i32, i32
  }
  func.func @transform_3(%arg0: i32) -> (i32, i32, i32) {
    %c0_i32 = arith.constant 0 : i32
    %c0_i32_0 = arith.constant 0 : i32
    %c0_i32_1 = arith.constant 0 : i32
    return %arg0, %c0_i32, %c0_i32_0 : i32, i32, i32
  }
}

</mosaic_0001>

<llo_original>
// kernel: reparam_block_spatial.1
$region0: #{reparam_block_spatial.1}
  #allocation0 [shape = 'u32[]', space=smem, size = 0x4, offset = 0x4, fixed_abs, tag = 'smem constant byte address 0x4 - core index']
  #allocation1 [shape = 'u32[144,128]{1,0:T(1,128)}', space=vmem, size = 0x12000, scoped, tag = 'internal scratch']
  %s0 = inlined_call_operand.vmem [shape: f32[2,36,256], index: 0, kind: input, shape index: {}]
  %s1 = inlined_call_operand.vmem [shape: f32[16,36], index: 1, kind: input, shape index: {}]
  %s2 = inlined_call_operand.vmem [shape: f32[16,1], index: 2, kind: input, shape index: {}]
  %s3 = inlined_call_operand.vmem [shape: f32[2,16,256], index: 3, kind: output, shape index: {}]
  %s4 = sld [smem:[#allocation0]]
  $region45: #{reparam_block_spatial.1} parent=0
    _
  %s6 = ssub.s32 1, %s4
  %s7 = scalar_select 0, %s6, %s4
  loop: start=0, step=1, limit=4
  $region2: #{reparam_block_spatial.1} parent=0 // loop_pre_header
    _
  $region3: #{reparam_block_spatial.1} parent=0 // loop_header
    %s9 = sphi 0, %s13
    %p10 = scmp.ge.s32.totalorder %s9, 4
    %s19 = sphi 0, %s21
    %s22 = sphi 0, %s19
    %s23 = sphi 0, %s22
    %s39 = sphi 0, %s23
    %s43 = sphi 0, %s43
    %s45 = sphi 0, %s43
    %s46 = sphi 0, %s45
    %s60 = sphi 0, %s46
    %s64 = sphi 0, %s64
    %s66 = sphi 0, %s64
    %s67 = sphi 0, %s66
    %s81 = sphi 0, %s67
    %s87 = sphi 0, %s89
    %s90 = sphi 0, %s87
    %s91 = sphi 0, %s90
    %s107 = sphi 0, %s91
  $region4: #{reparam_block_spatial.1} parent=0 // loop_header_branch
    %12 = sbr.rel (%p10) target = $region8
  $region5: #{reparam_block_spatial.1} parent=0 // loop_body
    %s14 = ssub.s32 %s9, 1
    %s15 = ssub.s32 %s9, 2
    %s16 = sadd.s32 %s9, 1
    %s17 = ssub.s32 %s9, %s16
    %p18 = scmp.eq.s32.totalorder %s17, 0
    %s20 = sadd.s32 %s19, 1
    %s21 = scalar_select %p18, %s19, %s20
    %p24 = pneg %p18
    %p25 = scmp.eq.s32.totalorder %s9, 1
    %p26 = por %p24, %p25
    %p27 = scmp.ne.s32.totalorder %s19, %s22
    %p28 = scmp.eq.s32.totalorder %s9, 0
    %p29 = por %p27, %p28
    %p30 = scmp.ne.s32.totalorder %s19, %s22
    %p31 = scmp.eq.s32.totalorder %s14, 1
    %p32 = por %p30, %p31
    %p33 = scmp.ne.s32.totalorder %s22, %s23
    %p34 = scmp.eq.s32.totalorder %s14, 0
    %p35 = por %p33, %p34
    %p36 = scmp.ne.s32.totalorder %s22, %s23
    %p37 = scmp.eq.s32.totalorder %s15, 1
    %p38 = por %p36, %p37
    %p40 = scmp.ne.s32.totalorder %s23, %s39
    %p41 = scmp.eq.s32.totalorder %s15, 0
    %p42 = por %p40, %p41
    %s44 = sadd.s32 %s43, 1
    %p47 = scmp.eq.s32.totalorder %s9, 1
    %p48 = scmp.ne.s32.totalorder %s43, %s45
    %p49 = scmp.eq.s32.totalorder %s9, 0
    %p50 = por %p48, %p49
    %p51 = scmp.ne.s32.totalorder %s43, %s45
    %p52 = scmp.eq.s32.totalorder %s14, 1
    %p53 = por %p51, %p52
    %p54 = scmp.ne.s32.totalorder %s45, %s46
    %p55 = scmp.eq.s32.totalorder %s14, 0
    %p56 = por %p54, %p55
    %p57 = scmp.ne.s32.totalorder %s45, %s46
    %p58 = scmp.eq.s32.totalorder %s15, 1
    %p59 = por %p57, %p58
    %p61 = scmp.ne.s32.totalorder %s46, %s60
    %p62 = scmp.eq.s32.totalorder %s15, 0
    %p63 = por %p61, %p62
    %s65 = sadd.s32 %s64, 1
    %p68 = scmp.eq.s32.totalorder %s9, 1
    %p69 = scmp.ne.s32.totalorder %s64, %s66
    %p70 = scmp.eq.s32.totalorder %s9, 0
    %p71 = por %p69, %p70
    %p72 = scmp.ne.s32.totalorder %s64, %s66
    %p73 = scmp.eq.s32.totalorder %s14, 1
    %p74 = por %p72, %p73
    %p75 = scmp.ne.s32.totalorder %s66, %s67
    %p76 = scmp.eq.s32.totalorder %s14, 0
    %p77 = por %p75, %p76
    %p78 = scmp.ne.s32.totalorder %s66, %s67
    %p79 = scmp.eq.s32.totalorder %s15, 1
    %p80 = por %p78, %p79
    %p82 = scmp.ne.s32.totalorder %s67, %s81
    %p83 = scmp.eq.s32.totalorder %s15, 0
    %p84 = por %p82, %p83
    %s85 = ssub.s32 %s9, %s16
    %p86 = scmp.eq.s32.totalorder %s85, 0
    %s88 = sadd.s32 %s87, 1
    %s89 = scalar_select %p86, %s87, %s88
    %p92 = pneg %p86
    %p93 = scmp.eq.s32.totalorder %s9, 1
    %p94 = por %p92, %p93
    %p95 = scmp.ne.s32.totalorder %s87, %s90
    %p96 = scmp.eq.s32.totalorder %s9, 0
    %p97 = por %p95, %p96
    %p98 = scmp.ne.s32.totalorder %s87, %s90
    %p99 = scmp.eq.s32.totalorder %s14, 1
    %p100 = por %p98, %p99
    %p101 = scmp.ne.s32.totalorder %s90, %s91
    %p102 = scmp.eq.s32.totalorder %s14, 0
    %p103 = por %p101, %p102
    %p104 = scmp.ne.s32.totalorder %s90, %s91
    %p105 = scmp.eq.s32.totalorder %s15, 1
    %p106 = por %p104, %p105
    %p108 = scmp.ne.s32.totalorder %s91, %s107
    %p109 = scmp.eq.s32.totalorder %s15, 0
    %p110 = por %p108, %p109
    %p111 = scmp.le.s32.totalorder 1, %s9
    %p112 = scmp.lt.s32.totalorder %s9, 3
    %p113 = pnand %p111, %p112
    %p114 = pneg %p113
    // Predicated region
    $region9: #{reparam_block_spatial.1} parent=5 // pred_check
      _
    $region10: #{reparam_block_spatial.1} parent=5 // pred_check_branch
      %116 = sbr.rel (%p113) target = $region12
    $region11: #{reparam_block_spatial.1} parent=5 // pred_region
      %s117 = ssub.s32 %s9, 1
      // Predicated region
      $region13: #{reparam_block_spatial.1} parent=11 // pred_check
        %p118 = pneg %p56
      $region14: #{reparam_block_spatial.1} parent=11 // pred_check_branch
        %120 = sbr.rel (%p118) target = $region16
      $region15: #{reparam_block_spatial.1} parent=11 // pred_region
        _
      $region16: #{reparam_block_spatial.1} parent=11 // pred_fallthru
        _
      // Predicated region
      $region17: #{reparam_block_spatial.1} parent=11 // pred_check
        %p121 = pneg %p77
      $region18: #{reparam_block_spatial.1} parent=11 // pred_check_branch
        %123 = sbr.rel (%p121) target = $region20
      $region19: #{reparam_block_spatial.1} parent=11 // pred_region
        _
      $region20: #{reparam_block_spatial.1} parent=11 // pred_fallthru
        _
    $region12: #{reparam_block_spatial.1} parent=5 // pred_fallthru
      _
    %p124 = scmp.lt.s32.totalorder %s9, 2
    // Predicated region
    $region21: #{reparam_block_spatial.1} parent=5 // pred_check
      %p125 = pneg %p124
    $region22: #{reparam_block_spatial.1} parent=5 // pred_check_branch
      %127 = sbr.rel (%p125) target = $region24
    $region23: #{reparam_block_spatial.1} parent=5 // pred_region
      // Predicated region
      $region25: #{reparam_block_spatial.1} parent=23 // pred_check
        %p128 = pneg %p29
      $region26: #{reparam_block_spatial.1} parent=23 // pred_check_branch
        %130 = sbr.rel (%p128) target = $region28
      $region27: #{reparam_block_spatial.1} parent=23 // pred_region
        %p131 = scmp.lt.s32.totalorder %s9, 1
        %s132 = scalar_select %p131, %s9, 1
        %s133 = smul.addr %s132, 10
        %s134 = smul.addr %s133, 8
        %s135 = scalar_lea.vmem %s0, %s134
      $region28: #{reparam_block_spatial.1} parent=23 // pred_fallthru
        _
    $region24: #{reparam_block_spatial.1} parent=5 // pred_fallthru
      _
    %p136 = scmp.le.s32.totalorder 1, %s9
    %p137 = scmp.lt.s32.totalorder %s9, 3
    %p138 = pnand %p136, %p137
    %p139 = pneg %p138
    // Predicated region
    $region29: #{reparam_block_spatial.1} parent=5 // pred_check
      _
    $region30: #{reparam_block_spatial.1} parent=5 // pred_check_branch
      %141 = sbr.rel (%p138) target = $region32
    $region31: #{reparam_block_spatial.1} parent=5 // pred_region
      %s142 = ssub.s32 %s9, 1
      %p143 = scmp.lt.s32.totalorder %s14, 1
      %s144 = scalar_select %p143, %s14, 1
      %s145 = smul.addr %s144, 10
      %s146 = smul.addr %s145, 8
      %s147 = scalar_lea.vmem %s0, %s146
      %p148 = pneg %p35
      %p149 = pneg %p32
      %p150 = pneg %p56
      %p151 = pneg %p53
      %p152 = pneg %p77
      %p153 = pneg %p74
      %p154 = pneg %p103
      %p155 = pneg %p100
      %p156 = scmp.lt.s32.totalorder %s14, 1
      %s157 = scalar_select %p156, %s14, 1
      %s158 = smul.addr %s157, 4
      %s159 = smul.addr %s158, 8
      %s160 = scalar_lea.vmem %s3, %s159
      %p161 = scmp.lt.s32.totalorder %s14, 1
      %s162 = scalar_select %p161, %s14, 1
      %s163 = smul.addr %s162, 10
      %s164 = smul.addr %s163, 8
      %s165 = scalar_lea.vmem %s0, %s164
      %p166 = scmp.lt.s32.totalorder %s14, 1
      %s167 = scalar_select %p166, %s14, 1
      %s168 = smul.addr %s167, 4
      %s169 = smul.addr %s168, 8
      %s170 = scalar_lea.vmem %s3, %s169
      %v171 = vld [vmem:[%s1] sm:$0xff]
      %v172 = vld [vmem:[%s1 + $0x8] sm:$0xff]
      %v173 = vld [vmem:[%s165] sm:$0xff]
      %v174 = vld [vmem:[%s165 + $0x8] sm:$0xff]
      %v175 = vld [vmem:[%s165 + $0x10] sm:$0xff]
      %v176 = vld [vmem:[%s165 + $0x18] sm:$0xff]
      %v177 = vld [vmem:[%s165 + $0x20] sm:$0xff]
      %v178 = vld [vmem:[%s165 + $0x28] sm:$0xff]
      %v179 = vld [vmem:[%s165 + $0x30] sm:$0xff]
      %v180 = vld [vmem:[%s165 + $0x38] sm:$0xff]
      %v181 = vld [vmem:[%s165 + $0x40] sm:$0xf]
      %v182 = vld [vmem:[%s165 + $0x48] sm:$0xf]
      %v183 = vld [vmem:[%s2] sm:$0xff]
      %v184 = vld [vmem:[%s2 + $0x8] sm:$0xff]
      %186 = vset.pattern.permute.xlu0 0
      %187 = vperm.xlu0 %186, %v183
      %v188 = vpop.permute.xlu0 %187
      %191 = vset.pattern.permute.xlu0 0
      %192 = vperm.xlu0 %191, %v184
      %v193 = vpop.permute.xlu0 %192
      %vm195 = vcmask 293888
      %v197 = vsel %vm195, %v171, 0
      %v200 = vsel %vm195, %v172, 0
      %vm202 = vcmask 1043456
      %v204 = vsel %vm202, %v181, 0
      %v207 = vsel %vm202, %v182, 0
      %209 = vmatprep.subr.mxu0 %v174
      %210 = vmatpush1.msra.mxu0 %v173
      %211 = vmatprep.subr.mxu0 %v176
      %212 = vmatpush1.msra.mxu0 %v175
      %213 = vmatprep.subr.mxu0 %v178
      %214 = vmatpush1.msra.mxu0 %v177
      %215 = vmatprep.subr.mxu0 %v180
      %216 = vmatpush1.msra.mxu0 %v179
      %217 = vmatprep.subr.mxu0 %v207
      %218 = vmatpush1.msra.mxu0 %v204
      %219 = vmatprep.subr.mxu0 0.0
      %220 = vmatpush1.msra.mxu0 0.0
      %221 = vmatprep.subr.mxu0 0.0
      %222 = vmatpush1.msra.mxu0 0.0
      %223 = vmatprep.subr.mxu0 0.0
      %224 = vmatpush1.msra.mxu0 0.0
      %225 = vmatprep.subr.mxu0 0.0
      %226 = vmatpush1.msra.mxu0 0.0
      %227 = vmatprep.subr.mxu0 0.0
      %228 = vmatpush1.msra.mxu0 0.0
      %229 = vmatprep.subr.mxu0 0.0
      %230 = vmatpush1.msra.mxu0 0.0
      %231 = vmatprep.subr.mxu0 0.0
      %232 = vmatpush1.msra.mxu0 0.0
      %233 = vmatprep.subr.mxu0 0.0
      %234 = vmatpush1.msra.mxu0 0.0
      %235 = vmatprep.subr.mxu0 0.0
      %236 = vmatpush1.msra.mxu0 0.0
      %237 = vmatprep.subr.mxu0 0.0
      %238 = vmatpush1.msra.mxu0 0.0
      %239 = vmatprep.subr.mxu0 0.0
      %240 = vmatpush1.msra.mxu0 0.0
      %241 = vmatprep.subr.mxu0 0.0
      %242 = vmatpush1.msra.mxu0 0.0
      %243 = vmatprep.subr.mxu0 0.0
      %244 = vmatpush1.msra.mxu0 0.0
      %245 = vmatprep.subr.mxu0 0.0
      %246 = vmatpush1.msra.mxu0 0.0
      %247 = vmatprep.subr.mxu0 0.0
      %248 = vmatpush1.msra.mxu0 0.0
      %249 = vmatprep.subr.mxu0 0.0
      %250 = vmatpush1.msra.mxu0 0.0
      %251 = vmatprep.subr.mxu0 0.0
      %252 = vmatpush1.msra.mxu0 0.0
      %253 = vmatprep.subr.mxu0 0.0
      %254 = vmatpush1.msra.mxu0 0.0
      %255 = vmatprep.subr.mxu0 0.0
      %256 = vmatpush1.msra.mxu0 0.0
      %257 = vmatprep.subr.mxu0 0.0
      %258 = vmatpush1.msra.mxu0 0.0
      %259 = vmatprep.subr.mxu0 0.0
      %260 = vmatpush1.msra.mxu0 0.0
      %261 = vmatprep.subr.mxu0 0.0
      %262 = vmatpush1.msra.mxu0 0.0
      %263 = vmatprep.subr.mxu0 0.0
      %264 = vmatpush1.msra.mxu0 0.0
      %265 = vmatprep.subr.mxu0 0.0
      %266 = vmatpush1.msra.mxu0 0.0
      %267 = vmatprep.subr.mxu0 0.0
      %268 = vmatpush1.msra.mxu0 0.0
      %269 = vmatprep.subr.mxu0 0.0
      %270 = vmatpush1.msra.mxu0 0.0
      %271 = vmatprep.subr.mxu0 0.0
      %272 = vmatpush1.msra.mxu0 0.0
      %273 = vmatprep.mubr.f32.mxu0 0.0
      %274 = vmatmul.mubr.f32.gmra.mrb[0].mxu0 %v197
      %v275 = vpop.f32.mrb[0].mxu0
      %v276 = vadd.f32 %v188, %v275
      %v277 = vpop.f32.mrb[0].mxu0
      %v278 = vadd.f32 %v188, %v277
      %279 = vmatprep.mubr.f32.mxu0 0.0
      %280 = vmatmul.mubr.f32.gmra.mrb[0].mxu0 %v200
      %v281 = vpop.f32.mrb[0].mxu0
      %v282 = vadd.f32 %v193, %v281
      %v283 = vpop.f32.mrb[0].mxu0
      %v284 = vadd.f32 %v193, %v283
      %285 = vdwg.mxu0
      %v286 = vmax.f32 %v276, 0.0
      %v287 = vmax.f32 %v278, 0.0
      %v288 = vmax.f32 %v282, 0.0
      %v289 = vmax.f32 %v284, 0.0
      %290 = vst [vmem:[%s170] sm:$0xff] %v286
      %291 = vst [vmem:[%s170 + $0x8] sm:$0xff] %v287
      %292 = vst [vmem:[%s170 + $0x10] sm:$0xff] %v288
      %293 = vst [vmem:[%s170 + $0x18] sm:$0xff] %v289
      %p294 = scmp.lt.s32.totalorder %s14, 1
      %s295 = scalar_select %p294, %s14, 1
      %s296 = smul.addr %s295, 4
      %s297 = smul.addr %s296, 8
      %s298 = scalar_lea.vmem %s3, %s297
      // Predicated region
      $region33: #{reparam_block_spatial.1} parent=31 // pred_check
        %p299 = pneg %p100
      $region34: #{reparam_block_spatial.1} parent=31 // pred_check_branch
        %301 = sbr.rel (%p299) target = $region36
      $region35: #{reparam_block_spatial.1} parent=31 // pred_region
        _
      $region36: #{reparam_block_spatial.1} parent=31 // pred_fallthru
        _
    $region32: #{reparam_block_spatial.1} parent=5 // pred_fallthru
      _
    %p302 = scmp.le.s32.totalorder 2, %s9
    // Predicated region
    $region37: #{reparam_block_spatial.1} parent=5 // pred_check
      %p303 = pneg %p302
    $region38: #{reparam_block_spatial.1} parent=5 // pred_check_branch
      %305 = sbr.rel (%p303) target = $region40
    $region39: #{reparam_block_spatial.1} parent=5 // pred_region
      %s306 = ssub.s32 %s9, 2
      // Predicated region
      $region41: #{reparam_block_spatial.1} parent=39 // pred_check
        %p307 = pneg %p106
      $region42: #{reparam_block_spatial.1} parent=39 // pred_check_branch
        %309 = sbr.rel (%p307) target = $region44
      $region43: #{reparam_block_spatial.1} parent=39 // pred_region
        %p310 = scmp.lt.s32.totalorder %s15, 1
        %s311 = scalar_select %p310, %s15, 1
        %s312 = smul.addr %s311, 4
        %s313 = smul.addr %s312, 8
        %s314 = scalar_lea.vmem %s3, %s313
      $region44: #{reparam_block_spatial.1} parent=39 // pred_fallthru
        _
    $region40: #{reparam_block_spatial.1} parent=5 // pred_fallthru
      _
  $region6: #{reparam_block_spatial.1} parent=0 // loop_footer
    %s13 = sadd.s32 1, %s9
  $region7: #{reparam_block_spatial.1} parent=0 // loop_footer_branch
    %8 = sbr.rel target = $region3
  $region8: #{reparam_block_spatial.1} parent=0 // loop_exit
    _

</llo_original>
